<compile_context>
chip_gen: v7x
topology: tpu7x:2x2x1
jax: 0.10.0
libtpu: 0.0.40
codegen_flags: <defaults>
</compile_context>

<pallas_src>
import math

import jax
import jax.numpy as jnp
from jax import lax
from jax.experimental import pallas as pl
from jax.experimental.pallas import tpu as pltpu

_PADVAL = -1.0
_LN_EPS = 1e-5          # torch.nn.LayerNorm default
_LANE = 128


def _round_up(x, m):
    return ((x + m - 1) // m) * m


# --------------------------------------------------------------------------
# Shared masked LayerNorm (all math in f32, matches the 1e-4 tolerance).
#   m_row  : 1.0 on valid dims, 0.0 on padded dims           (1, max_d_pad)
#   md_row : m_row * (1 / d_i)  -> inv_d baked in            (1, max_d_pad)
# --------------------------------------------------------------------------
def _masked_layer_norm(emb, w_row, b_row, m_row, md_row):
    mean = jnp.sum(emb * md_row, axis=-1, keepdims=True)
    centered = (emb - mean) * m_row
    var = jnp.sum(centered * centered * md_row, axis=-1, keepdims=True)
    inv = lax.rsqrt(var + _LN_EPS)
    normed = centered * inv * w_row + b_row
    # valid lanes -> normed, padded lanes -> -1.0 (pad_sequence(padding_value=-1))
    return normed * m_row + (m_row - 1.0)


# --------------------------------------------------------------------------
# Fast path: per-category table block streamed into VMEM by BlockSpec; gather
# rows with dynamic pl.ds slices inside VMEM.
# --------------------------------------------------------------------------
def _stream_gather_kernel(x_ref, tbl_ref, w_ref, b_ref, m_ref, md_ref,
                          out_ref, gbuf):
    # x_ref : SMEM (s * batch_pad,) int32   (scalar prefetch, flat 1-D)
    # tbl_ref: VMEM (1, max_c, max_d_pad)   (this category's table block)
    # w/b/m/md_ref: VMEM (s, max_d_pad)     (resident across the whole grid)
    # out_ref: VMEM (1, batch_tile, max_d_pad)
    # gbuf  : VMEM (batch_tile, max_d_pad)  scratch (tables dtype)
    bt = pl.program_id(0)
    i = pl.program_id(1)
    batch_tile = gbuf.shape[0]
    batch_pad = pl.num_programs(0) * batch_tile
    base = i * batch_pad + bt * batch_tile

    if batch_tile <= 16:
        for b in range(batch_tile):
            idx = x_ref[base + b]
            gbuf[pl.ds(b, 1), :] = tbl_ref[0, pl.ds(idx, 1), :]
    else:
        def body(b, carry):
            idx = x_ref[base + b]
            gbuf[pl.ds(b, 1), :] = tbl_ref[0, pl.ds(idx, 1), :]
            return carry
        lax.fori_loop(0, batch_tile, body, 0, unroll=8)

    w_row = w_ref[pl.ds(i, 1), :]
    b_row = b_ref[pl.ds(i, 1), :]
    m_row = m_ref[pl.ds(i, 1), :]
    md_row = md_ref[pl.ds(i, 1), :]
    out_ref[0] = _masked_layer_norm(gbuf[...].astype(jnp.float32),
                                    w_row, b_row, m_row, md_row)


# --------------------------------------------------------------------------
# Large-cardinality path: table stays in HBM; per-row DMAs double-buffered
# across the category axis (prefetch category i+1 during category i's compute).
# --------------------------------------------------------------------------
def _hbm_gather_kernel(x_ref, tbl_ref, w_ref, b_ref, m_ref, md_ref,
                       out_ref, gbuf, sem):
    # tbl_ref: HBM (s, max_c, max_d_pad)   (memory_space=pl.ANY, manual DMA)
    # gbuf  : VMEM (2, batch_tile, max_d_pad)    double buffer
    # sem   : DMA semaphores (2, batch_tile)
    bt = pl.program_id(0)
    i = pl.program_id(1)
    n_cat = pl.num_programs(1)
    batch_tile = gbuf.shape[1]
    batch_pad = pl.num_programs(0) * batch_tile

    def start_gather(cat, slot):
        base = cat * batch_pad + bt * batch_tile
        if batch_tile <= 32:
            # Hoist all SMEM index reads before any DMA (.wait breaks sst->sld).
            idxs = [x_ref[base + b] for b in range(batch_tile)]
            for b in range(batch_tile):
                pltpu.make_async_copy(
                    tbl_ref.at[cat, pl.ds(idxs[b], 1), :],
                    gbuf.at[slot, pl.ds(b, 1), :],
                    sem.at[slot, b],
                ).start()
        else:
            def body(b, carry):
                pltpu.make_async_copy(
                    tbl_ref.at[cat, pl.ds(x_ref[base + b], 1), :],
                    gbuf.at[slot, pl.ds(b, 1), :],
                    sem.at[slot, b],
                ).start()
                return carry
            lax.fori_loop(0, batch_tile, body, 0, unroll=8)

    def wait_gather(slot):
        # Dummy-src descriptors: wait only needs the dst shape + semaphore,
        # so SMEM indices are never re-read here.
        if batch_tile <= 32:
            for b in range(batch_tile):
                pltpu.make_async_copy(
                    tbl_ref.at[0, pl.ds(0, 1), :],
                    gbuf.at[slot, pl.ds(b, 1), :],
                    sem.at[slot, b],
                ).wait()
        else:
            def body(b, carry):
                pltpu.make_async_copy(
                    tbl_ref.at[0, pl.ds(0, 1), :],
                    gbuf.at[slot, pl.ds(b, 1), :],
                    sem.at[slot, b],
                ).wait()
                return carry
            lax.fori_loop(0, batch_tile, body, 0, unroll=8)

    slot = i % 2

    @pl.when(i == 0)
    def _():                       # prime slot 0 at the start of each batch tile
        start_gather(i, slot)

    @pl.when(i + 1 < n_cat)
    def _():                       # prefetch next category into the other slot
        start_gather(i + 1, 1 - slot)

    wait_gather(slot)

    w_row = w_ref[pl.ds(i, 1), :]
    b_row = b_ref[pl.ds(i, 1), :]
    m_row = m_ref[pl.ds(i, 1), :]
    md_row = md_ref[pl.ds(i, 1), :]
    out_ref[0] = _masked_layer_norm(gbuf[slot].astype(jnp.float32),
                                    w_row, b_row, m_row, md_row)


# --------------------------------------------------------------------------
# Wrapper
# --------------------------------------------------------------------------
def categorical_embedding_fwd(x, tables, ln_w, ln_b, d_sizes, max_d,
                              stream_table_bytes=2 * 1024 * 1024,
                              batch_tile_max=128):
    """x: (n_categories, batch) int.  Returns (emb (s, b, max_d), mask (b, s))."""
    s, max_c, max_d_pad = tables.shape
    assert max_c % 8 == 0 and max_d_pad % _LANE == 0
    n_cat, batch = x.shape
    assert n_cat == s

    # Batch tiling (review opt 7): tile is a multiple of 8; pad batch up to it.
    batch_tile = min(_round_up(batch, 8), batch_tile_max)
    batch_pad = _round_up(batch, batch_tile)
    n_bt = batch_pad // batch_tile

    x_p = x.astype(jnp.int32)
    if batch_pad != batch:
        x_p = jnp.pad(x_p, ((0, 0), (0, batch_pad - batch)))   # pad rows -> index 0
    x_flat = x_p.reshape(-1)                                    # 1-D SMEM layout (opt 6)

    # Resident per-category mask and mask/d (inv_d baked in)   (opt 5)
    col = jnp.arange(max_d_pad, dtype=jnp.int32)[None, :]
    m = (col < d_sizes[:, None]).astype(jnp.float32)            # (s, max_d_pad)
    md = m / d_sizes[:, None].astype(jnp.float32)

    resident = lambda bt, i, xs: (0, 0)
    common_in = [
        pl.BlockSpec((s, max_d_pad), resident),    # ln_w  (fetched once, stays in VMEM)
        pl.BlockSpec((s, max_d_pad), resident),    # ln_b
        pl.BlockSpec((s, max_d_pad), resident),    # valid mask
        pl.BlockSpec((s, max_d_pad), resident),    # mask / d
    ]
    out_spec = pl.BlockSpec((1, batch_tile, max_d_pad),
                            lambda bt, i, xs: (i, bt, 0))

    per_cat_bytes = max_c * max_d_pad * tables.dtype.itemsize
    if per_cat_bytes <= stream_table_bytes:
        # Fast path: whole per-category table streamed by BlockSpec (opt 2).
        kernel = _stream_gather_kernel
        tbl_spec = pl.BlockSpec((1, max_c, max_d_pad), lambda bt, i, xs: (i, 0, 0))
        scratch = [pltpu.VMEM((batch_tile, max_d_pad), tables.dtype)]
    else:
        # Large cardinality: manual double-buffered HBM row gather (opt 1).
        # TODO(synk): bf16 tables only pay off on the streamed path; per-row
        # DMAs would drop to 256 B, so keep f32 rows here.
        kernel = _hbm_gather_kernel
        tbl_spec = pl.BlockSpec(memory_space=pl.ANY)
        scratch = [pltpu.VMEM((2, batch_tile, max_d_pad), tables.dtype),
                   pltpu.SemaphoreType.DMA((2, batch_tile))]

    grid_spec = pltpu.PrefetchScalarGridSpec(
        num_scalar_prefetch=1,                      # x_flat -> SMEM
        grid=(n_bt, s),                             # batch tiles outer, categories inner
        in_specs=[tbl_spec] + common_in,
        out_specs=out_spec,
        scratch_shapes=scratch,
    )

    emb_pad = pl.pallas_call(
        kernel,
        out_shape=jax.ShapeDtypeStruct((s, batch_pad, max_d_pad), jnp.float32),
        grid_spec=grid_spec,
        compiler_params=pltpu.CompilerParams(
            dimension_semantics=("parallel", "arbitrary")),
    )(x_flat, tables, ln_w, ln_b, m, md)

    emb = emb_pad[:, :batch, :max_d]               # 's b d' padded_emb_tensor
    padding_mask = (emb[:, :, 0] == _PADVAL).T     # (batch, n_categories) bool
    return emb, padding_mask


# --------------------------------------------------------------------------
# Parameter construction matching the PyTorch __init__ shapes.
# --------------------------------------------------------------------------
def make_params(cardinalities, key):
    dims = [int(math.ceil(c ** 0.5) + 1) for c in cardinalities]
    s = len(cardinalities)
    max_c = _round_up(max(cardinalities), 8)       # sublane-friendly table rows
    max_d = max(dims)
    max_d_pad = _round_up(max_d, _LANE)            # lane-dense kernel layout

    tables = jnp.zeros((s, max_c, max_d_pad), jnp.float32)
    for i, (c, d) in enumerate(zip(cardinalities, dims)):
        key, sub = jax.random.split(key)
        w = jax.random.normal(sub, (c, d), jnp.float32)   # nn.Embedding ~ N(0,1)
        tables = tables.at[i, :c, :d].set(w)

    ln_w = jnp.zeros((s, max_d_pad), jnp.float32)
    ln_b = jnp.zeros((s, max_d_pad), jnp.float32)
    for i, d in enumerate(dims):
        ln_w = ln_w.at[i, :d].set(1.0)                    # LayerNorm default init
    d_sizes = jnp.array(dims, jnp.int32)
    return tables, ln_w, ln_b, d_sizes, max_d


def reference(x, tables, ln_w, ln_b, d_sizes, max_d):
    """Pure-JAX reference mirroring the PyTorch forward."""
    s = tables.shape[0]
    batch = x.shape[1]
    out = jnp.full((s, batch, max_d), _PADVAL, jnp.float32)
    for i in range(s):
        d = int(d_sizes[i])
        e = tables[i][x[i], :d]
        mean = e.mean(-1, keepdims=True)
        var = ((e - mean) ** 2).mean(-1, keepdims=True)
        n = (e - mean) / jnp.sqrt(var + _LN_EPS) * ln_w[i, :d] + ln_b[i, :d]
        out = out.at[i, :, :d].set(n)
    mask = (out[:, :, 0] == _PADVAL).T
    return out, mask


if __name__ == "__main__":
    def run_case(cardinalities, batch, key):
        kparam, kdata = jax.random.split(key)
        tables, ln_w, ln_b, d_sizes, max_d = make_params(cardinalities, kparam)
        rows = []
        for c in cardinalities:
            kdata, sub = jax.random.split(kdata)
            rows.append(jax.random.randint(sub, (batch,), 0, c, jnp.int32))
        x = jnp.stack(rows, axis=0)                 # (n_categories, batch)

        emb, mask = categorical_embedding_fwd(x, tables, ln_w, ln_b, d_sizes, max_d)
        jax.block_until_ready((emb, mask))

        emb_ref, mask_ref = reference(x, tables, ln_w, ln_b, d_sizes, max_d)
        assert emb.shape == (len(cardinalities), batch, max_d)
        assert mask.shape == (batch, len(cardinalities))
        assert jnp.allclose(emb, emb_ref, rtol=1e-4, atol=1e-4), "emb mismatch"
        assert bool(jnp.all(mask == mask_ref)), "mask mismatch"

    key = jax.random.PRNGKey(0)
    k1, k2 = jax.random.split(key)
    # Streamed-table fast path (small cardinalities).
    run_case([10, 7, 23, 5], batch=8, key=k1)
    # Manual double-buffered HBM gather path (large cardinality).
    run_case([16000, 30], batch=8, key=k2)

    print("KERNEL_OK")
</pallas_src>

<mosaic_0001>
module attributes {stable_mosaic.version = 11 : i64} {
  func.func @_stream_gather_kernel(%arg0: i32, %arg1: i32, %arg2: memref<32xi32, #tpu.memory_space<smem>>, %arg3: memref<1x24x128xf32, #tpu.memory_space<vmem>>, %arg4: memref<4x128xf32, #tpu.memory_space<vmem>>, %arg5: memref<4x128xf32, #tpu.memory_space<vmem>>, %arg6: memref<4x128xf32, #tpu.memory_space<vmem>>, %arg7: memref<4x128xf32, #tpu.memory_space<vmem>>, %arg8: memref<1x8x128xf32, #tpu.memory_space<vmem>>, %arg9: memref<8x128xf32, #tpu.memory_space<vmem>>) attributes {dimension_semantics = [#tpu.dimension_semantics<parallel>, #tpu.dimension_semantics<arbitrary>], iteration_bounds = array<i64: 1, 4>, scalar_prefetch = 1 : i64, scratch_operands = 1 : i64, tpu.core_type = #tpu.core_type<tc>, window_params = [{transform_indices = @transform_0, window_bounds = array<i64: 1, 24, 128>}, {pipeline_mode = #tpu.pipeline_mode<synchronous>, transform_indices = @transform_1, window_bounds = array<i64: 4, 128>}, {pipeline_mode = #tpu.pipeline_mode<synchronous>, transform_indices = @transform_2, window_bounds = array<i64: 4, 128>}, {pipeline_mode = #tpu.pipeline_mode<synchronous>, transform_indices = @transform_3, window_bounds = array<i64: 4, 128>}, {pipeline_mode = #tpu.pipeline_mode<synchronous>, transform_indices = @transform_4, window_bounds = array<i64: 4, 128>}, {transform_indices = @transform_5, window_bounds = array<i64: 1, 8, 128>}]} {
    %c8_i32 = arith.constant 8 : i32
    %0 = arith.muli %arg1, %c8_i32 : i32
    %c8_i32_0 = arith.constant 8 : i32
    %1 = arith.muli %arg0, %c8_i32_0 : i32
    %2 = arith.addi %0, %1 : i32
    %c0_i32 = arith.constant 0 : i32
    %3 = arith.addi %2, %c0_i32 : i32
    %4 = arith.index_cast %3 : i32 to index
    %5 = memref.load %arg2[%4] : memref<32xi32, #tpu.memory_space<smem>>
    %c0 = arith.constant 0 : index
    %6 = arith.index_cast %5 : i32 to index
    %c0_1 = arith.constant 0 : index
    %7 = vector.load %arg3[%c0, %6, %c0_1] : memref<1x24x128xf32, #tpu.memory_space<vmem>>, vector<1x1x128xf32>
    %8 = vector.shape_cast %7 : vector<1x1x128xf32> to vector<1x128xf32>
    %c0_2 = arith.constant 0 : index
    %c0_3 = arith.constant 0 : index
    %9 = vector.load %arg9[%c0_2, %c0_3] : memref<8x128xf32, #tpu.memory_space<vmem>>, vector<1x128xf32>
    tpu.vector_store %arg9[%c0_2, %c0_3], %8 {strides = array<i32>} : memref<8x128xf32, #tpu.memory_space<vmem>>, vector<1x128xf32>,
    %c1_i32 = arith.constant 1 : i32
    %10 = arith.addi %2, %c1_i32 : i32
    %11 = arith.index_cast %10 : i32 to index
    %12 = memref.load %arg2[%11] : memref<32xi32, #tpu.memory_space<smem>>
    %c0_4 = arith.constant 0 : index
    %13 = arith.index_cast %12 : i32 to index
    %c0_5 = arith.constant 0 : index
    %14 = vector.load %arg3[%c0_4, %13, %c0_5] : memref<1x24x128xf32, #tpu.memory_space<vmem>>, vector<1x1x128xf32>
    %15 = vector.shape_cast %14 : vector<1x1x128xf32> to vector<1x128xf32>
    %c1 = arith.constant 1 : index
    %c0_6 = arith.constant 0 : index
    %16 = vector.load %arg9[%c1, %c0_6] : memref<8x128xf32, #tpu.memory_space<vmem>>, vector<1x128xf32>
    tpu.vector_store %arg9[%c1, %c0_6], %15 {strides = array<i32>} : memref<8x128xf32, #tpu.memory_space<vmem>>, vector<1x128xf32>,
    %c2_i32 = arith.constant 2 : i32
    %17 = arith.addi %2, %c2_i32 : i32
    %18 = arith.index_cast %17 : i32 to index
    %19 = memref.load %arg2[%18] : memref<32xi32, #tpu.memory_space<smem>>
    %c0_7 = arith.constant 0 : index
    %20 = arith.index_cast %19 : i32 to index
    %c0_8 = arith.constant 0 : index
    %21 = vector.load %arg3[%c0_7, %20, %c0_8] : memref<1x24x128xf32, #tpu.memory_space<vmem>>, vector<1x1x128xf32>
    %22 = vector.shape_cast %21 : vector<1x1x128xf32> to vector<1x128xf32>
    %c2 = arith.constant 2 : index
    %c0_9 = arith.constant 0 : index
    %23 = vector.load %arg9[%c2, %c0_9] : memref<8x128xf32, #tpu.memory_space<vmem>>, vector<1x128xf32>
    tpu.vector_store %arg9[%c2, %c0_9], %22 {strides = array<i32>} : memref<8x128xf32, #tpu.memory_space<vmem>>, vector<1x128xf32>,
    %c3_i32 = arith.constant 3 : i32
    %24 = arith.addi %2, %c3_i32 : i32
    %25 = arith.index_cast %24 : i32 to index
    %26 = memref.load %arg2[%25] : memref<32xi32, #tpu.memory_space<smem>>
    %c0_10 = arith.constant 0 : index
    %27 = arith.index_cast %26 : i32 to index
    %c0_11 = arith.constant 0 : index
    %28 = vector.load %arg3[%c0_10, %27, %c0_11] : memref<1x24x128xf32, #tpu.memory_space<vmem>>, vector<1x1x128xf32>
    %29 = vector.shape_cast %28 : vector<1x1x128xf32> to vector<1x128xf32>
    %c3 = arith.constant 3 : index
    %c0_12 = arith.constant 0 : index
    %30 = vector.load %arg9[%c3, %c0_12] : memref<8x128xf32, #tpu.memory_space<vmem>>, vector<1x128xf32>
    tpu.vector_store %arg9[%c3, %c0_12], %29 {strides = array<i32>} : memref<8x128xf32, #tpu.memory_space<vmem>>, vector<1x128xf32>,
    %c4_i32 = arith.constant 4 : i32
    %31 = arith.addi %2, %c4_i32 : i32
    %32 = arith.index_cast %31 : i32 to index
    %33 = memref.load %arg2[%32] : memref<32xi32, #tpu.memory_space<smem>>
    %c0_13 = arith.constant 0 : index
    %34 = arith.index_cast %33 : i32 to index
    %c0_14 = arith.constant 0 : index
    %35 = vector.load %arg3[%c0_13, %34, %c0_14] : memref<1x24x128xf32, #tpu.memory_space<vmem>>, vector<1x1x128xf32>
    %36 = vector.shape_cast %35 : vector<1x1x128xf32> to vector<1x128xf32>
    %c4 = arith.constant 4 : index
    %c0_15 = arith.constant 0 : index
    %37 = vector.load %arg9[%c4, %c0_15] : memref<8x128xf32, #tpu.memory_space<vmem>>, vector<1x128xf32>
    tpu.vector_store %arg9[%c4, %c0_15], %36 {strides = array<i32>} : memref<8x128xf32, #tpu.memory_space<vmem>>, vector<1x128xf32>,
    %c5_i32 = arith.constant 5 : i32
    %38 = arith.addi %2, %c5_i32 : i32
    %39 = arith.index_cast %38 : i32 to index
    %40 = memref.load %arg2[%39] : memref<32xi32, #tpu.memory_space<smem>>
    %c0_16 = arith.constant 0 : index
    %41 = arith.index_cast %40 : i32 to index
    %c0_17 = arith.constant 0 : index
    %42 = vector.load %arg3[%c0_16, %41, %c0_17] : memref<1x24x128xf32, #tpu.memory_space<vmem>>, vector<1x1x128xf32>
    %43 = vector.shape_cast %42 : vector<1x1x128xf32> to vector<1x128xf32>
    %c5 = arith.constant 5 : index
    %c0_18 = arith.constant 0 : index
    %44 = vector.load %arg9[%c5, %c0_18] : memref<8x128xf32, #tpu.memory_space<vmem>>, vector<1x128xf32>
    tpu.vector_store %arg9[%c5, %c0_18], %43 {strides = array<i32>} : memref<8x128xf32, #tpu.memory_space<vmem>>, vector<1x128xf32>,
    %c6_i32 = arith.constant 6 : i32
    %45 = arith.addi %2, %c6_i32 : i32
    %46 = arith.index_cast %45 : i32 to index
    %47 = memref.load %arg2[%46] : memref<32xi32, #tpu.memory_space<smem>>
    %c0_19 = arith.constant 0 : index
    %48 = arith.index_cast %47 : i32 to index
    %c0_20 = arith.constant 0 : index
    %49 = vector.load %arg3[%c0_19, %48, %c0_20] : memref<1x24x128xf32, #tpu.memory_space<vmem>>, vector<1x1x128xf32>
    %50 = vector.shape_cast %49 : vector<1x1x128xf32> to vector<1x128xf32>
    %c6 = arith.constant 6 : index
    %c0_21 = arith.constant 0 : index
    %51 = vector.load %arg9[%c6, %c0_21] : memref<8x128xf32, #tpu.memory_space<vmem>>, vector<1x128xf32>
    tpu.vector_store %arg9[%c6, %c0_21], %50 {strides = array<i32>} : memref<8x128xf32, #tpu.memory_space<vmem>>, vector<1x128xf32>,
    %c7_i32 = arith.constant 7 : i32
    %52 = arith.addi %2, %c7_i32 : i32
    %53 = arith.index_cast %52 : i32 to index
    %54 = memref.load %arg2[%53] : memref<32xi32, #tpu.memory_space<smem>>
    %c0_22 = arith.constant 0 : index
    %55 = arith.index_cast %54 : i32 to index
    %c0_23 = arith.constant 0 : index
    %56 = vector.load %arg3[%c0_22, %55, %c0_23] : memref<1x24x128xf32, #tpu.memory_space<vmem>>, vector<1x1x128xf32>
    %57 = vector.shape_cast %56 : vector<1x1x128xf32> to vector<1x128xf32>
    %c7 = arith.constant 7 : index
    %c0_24 = arith.constant 0 : index
    %58 = vector.load %arg9[%c7, %c0_24] : memref<8x128xf32, #tpu.memory_space<vmem>>, vector<1x128xf32>
    tpu.vector_store %arg9[%c7, %c0_24], %57 {strides = array<i32>} : memref<8x128xf32, #tpu.memory_space<vmem>>, vector<1x128xf32>,
    %59 = arith.index_cast %arg1 : i32 to index
    %c0_25 = arith.constant 0 : index
    %60 = vector.load %arg4[%59, %c0_25] : memref<4x128xf32, #tpu.memory_space<vmem>>, vector<1x128xf32>
    %61 = arith.index_cast %arg1 : i32 to index
    %c0_26 = arith.constant 0 : index
    %62 = vector.load %arg5[%61, %c0_26] : memref<4x128xf32, #tpu.memory_space<vmem>>, vector<1x128xf32>
    %63 = arith.index_cast %arg1 : i32 to index
    %c0_27 = arith.constant 0 : index
    %64 = vector.load %arg6[%63, %c0_27] : memref<4x128xf32, #tpu.memory_space<vmem>>, vector<1x128xf32>
    %65 = arith.index_cast %arg1 : i32 to index
    %c0_28 = arith.constant 0 : index
    %66 = vector.load %arg7[%65, %c0_28] : memref<4x128xf32, #tpu.memory_space<vmem>>, vector<1x128xf32>
    %c0_29 = arith.constant 0 : index
    %c0_30 = arith.constant 0 : index
    %67 = vector.load %arg9[%c0_29, %c0_30] : memref<8x128xf32, #tpu.memory_space<vmem>>, vector<8x128xf32>
    %68 = vector.broadcast %66 : vector<1x128xf32> to vector<8x128xf32>
    %69 = arith.mulf %67, %68 : vector<8x128xf32>
    %cst = arith.constant dense<0.000000e+00> : vector<8xf32>
    %70 = vector.multi_reduction <add>, %69, %cst [1] : vector<8x128xf32> to vector<8xf32>
    %71 = vector.shape_cast %70 : vector<8xf32> to vector<8x1xf32>
    %72 = vector.broadcast %71 : vector<8x1xf32> to vector<8x128xf32>
    %73 = arith.subf %67, %72 : vector<8x128xf32>
    %74 = vector.broadcast %64 : vector<1x128xf32> to vector<8x128xf32>
    %75 = arith.mulf %73, %74 : vector<8x128xf32>
    %76 = arith.mulf %75, %75 : vector<8x128xf32>
    %77 = vector.broadcast %66 : vector<1x128xf32> to vector<8x128xf32>
    %78 = arith.mulf %76, %77 : vector<8x128xf32>
    %cst_31 = arith.constant dense<0.000000e+00> : vector<8xf32>
    %79 = vector.multi_reduction <add>, %78, %cst_31 [1] : vector<8x128xf32> to vector<8xf32>
    %80 = vector.shape_cast %79 : vector<8xf32> to vector<8x1xf32>
    %cst_32 = arith.constant 9.99999974E-6 : f32
    %81 = vector.broadcast %cst_32 : f32 to vector<8x1xf32>
    %82 = arith.addf %80, %81 : vector<8x1xf32>
    %83 = math.rsqrt %82 : vector<8x1xf32>
    %84 = vector.broadcast %83 : vector<8x1xf32> to vector<8x128xf32>
    %85 = arith.mulf %75, %84 : vector<8x128xf32>
    %86 = vector.broadcast %60 : vector<1x128xf32> to vector<8x128xf32>
    %87 = arith.mulf %85, %86 : vector<8x128xf32>
    %88 = vector.broadcast %62 : vector<1x128xf32> to vector<8x128xf32>
    %89 = arith.addf %87, %88 : vector<8x128xf32>
    %90 = vector.broadcast %64 : vector<1x128xf32> to vector<8x128xf32>
    %91 = arith.mulf %89, %90 : vector<8x128xf32>
    %cst_33 = arith.constant 1.000000e+00 : f32
    %92 = vector.broadcast %cst_33 : f32 to vector<1x128xf32>
    %93 = arith.subf %64, %92 : vector<1x128xf32>
    %94 = vector.broadcast %93 : vector<1x128xf32> to vector<8x128xf32>
    %95 = arith.addf %91, %94 : vector<8x128xf32>
    %c0_34 = arith.constant 0 : index
    %c0_35 = arith.constant 0 : index
    %c0_36 = arith.constant 0 : index
    %96 = vector.load %arg8[%c0_34, %c0_35, %c0_36] : memref<1x8x128xf32, #tpu.memory_space<vmem>>, vector<1x8x128xf32>
    %97 = vector.shape_cast %96 : vector<1x8x128xf32> to vector<8x128xf32>
    %98 = vector.shape_cast %95 : vector<8x128xf32> to vector<1x8x128xf32>
    tpu.vector_store %arg8[%c0_34, %c0_35, %c0_36], %98 {strides = array<i32>} : memref<1x8x128xf32, #tpu.memory_space<vmem>>, vector<1x8x128xf32>,
    return
  }
  func.func @transform_0(%arg0: i32, %arg1: i32, %arg2: memref<32xi32, #tpu.memory_space<smem>>) -> (i32, i32, i32) {
    %c0_i32 = arith.constant 0 : i32
    %c0_i32_0 = arith.constant 0 : i32
    %c0_i32_1 = arith.constant 0 : i32
    return %arg1, %c0_i32, %c0_i32_0 : i32, i32, i32
  }
  func.func @transform_1(%arg0: i32, %arg1: i32, %arg2: memref<32xi32, #tpu.memory_space<smem>>) -> (i32, i32) {
    %c0_i32 = arith.constant 0 : i32
    %c0_i32_0 = arith.constant 0 : i32
    %c0_i32_1 = arith.constant 0 : i32
    return %c0_i32, %c0_i32_0 : i32, i32
  }
  func.func @transform_2(%arg0: i32, %arg1: i32, %arg2: memref<32xi32, #tpu.memory_space<smem>>) -> (i32, i32) {
    %c0_i32 = arith.constant 0 : i32
    %c0_i32_0 = arith.constant 0 : i32
    %c0_i32_1 = arith.constant 0 : i32
    return %c0_i32, %c0_i32_0 : i32, i32
  }
  func.func @transform_3(%arg0: i32, %arg1: i32, %arg2: memref<32xi32, #tpu.memory_space<smem>>) -> (i32, i32) {
    %c0_i32 = arith.constant 0 : i32
    %c0_i32_0 = arith.constant 0 : i32
    %c0_i32_1 = arith.constant 0 : i32
    return %c0_i32, %c0_i32_0 : i32, i32
  }
  func.func @transform_4(%arg0: i32, %arg1: i32, %arg2: memref<32xi32, #tpu.memory_space<smem>>) -> (i32, i32) {
    %c0_i32 = arith.constant 0 : i32
    %c0_i32_0 = arith.constant 0 : i32
    %c0_i32_1 = arith.constant 0 : i32
    return %c0_i32, %c0_i32_0 : i32, i32
  }
  func.func @transform_5(%arg0: i32, %arg1: i32, %arg2: memref<32xi32, #tpu.memory_space<smem>>) -> (i32, i32, i32) {
    %c0_i32 = arith.constant 0 : i32
    %c0_i32_0 = arith.constant 0 : i32
    return %arg1, %arg0, %c0_i32 : i32, i32, i32
  }
}

</mosaic_0001>

<llo_original>
// kernel: tpu_custom_call.1
$region0: #{tpu_custom_call.1}
  #allocation0 [shape = 'u32[]', space=smem, size = 0x4, offset = 0x4, fixed_abs, tag = 'smem constant byte address 0x4 - core index']
  #allocation1 [shape = 'u32[144,128]{1,0:T(1,128)}', space=vmem, size = 0x12000, scoped, tag = 'internal scratch']
  #allocation2 [shape = 'f32[8,128]{1,0:T(8,128)}', space=vmem, size = 0x1000, scoped, tag = 'scratch operand']
  #allocation3 [shape = 's32[1]{0}', space=sflag, size = 0x4, scoped, tag = 'scoped memory for tpu_custom_call.1']
  #allocation4 [shape = 'u8[512]{0}', space=smem, size = 0x200, scoped, tag = 'prefetched SMEM operand 0']
  %s0 = inlined_call_operand.hbm [shape: s32[32], index: 0, kind: input, shape index: {}]
  %s1 = inlined_call_operand.hbm [shape: f32[4,24,128], index: 1, kind: input, shape index: {}]
  %s2 = inlined_call_operand.vmem [shape: f32[4,128], index: 2, kind: input, shape index: {}]
  %s3 = inlined_call_operand.vmem [shape: f32[4,128], index: 3, kind: input, shape index: {}]
  %s4 = inlined_call_operand.vmem [shape: f32[4,128], index: 4, kind: input, shape index: {}]
  %s5 = inlined_call_operand.vmem [shape: f32[4,128], index: 5, kind: input, shape index: {}]
  %s6 = inlined_call_operand.hbm [shape: f32[4,8,128], index: 6, kind: output, shape index: {}]
  %s7 = sld [smem:[#allocation0]]
  $region57: #{tpu_custom_call.1} parent=0
    _
  %s9 = ssub.s32 1, %s7
  %s10 = scalar_select 0, %s9, %s7
  %12 = dma.hbm_to_smem %s0, 16, [#allocation4], [#allocation3]
  %13 = dma.done [#allocation3], 16
  %14 = sfence
  $region1: #{tpu_custom_call.1} parent=0
    #allocation5 [shape = 'u8[24576]{0}', space=vmem, size = 0x6000, scoped, tag = 'input window, operand 1']
    #allocation6 [shape = 's32[2]{0}', space=sflag, size = 0x8, scoped, tag = 'scoped memory for tpu_custom_call.1']
    #allocation7 [shape = 's32[2]{0}', space=sflag, size = 0x8, scoped, tag = 'scoped memory for tpu_custom_call.1']
    #allocation8 [shape = 'u8[8192]{0}', space=vmem, size = 0x2000, scoped, tag = 'output window, operand 0']
    %15 = vsyncpa [#allocation6], 0
    %s16 = scalar_lea.sflag [#allocation6], 1
    %17 = vsyncpa %s16, 0
    %18 = vsyncpa [#allocation7], 0
    %s19 = scalar_lea.sflag [#allocation7], 1
    %20 = vsyncpa %s19, 0
    loop: start=0, step=1, limit=6
    $region2: #{tpu_custom_call.1} parent=1 // loop_pre_header
      _
    $region3: #{tpu_custom_call.1} parent=1 // loop_header
      %s22 = sphi 0, %s26
      %p23 = scmp.ge.s32.totalorder %s22, 6
      %s29 = sphi 0, %s41
      %s30 = sphi 0, %s37
      %s31 = sphi 0, %s29
      %s32 = sphi 0, %s30
      %s33 = sphi 0, %s31
      %s34 = sphi 0, %s32
      %s44 = sphi 0, %s46
      %s47 = sphi 0, %s44
      %s48 = sphi 0, %s47
      %s64 = sphi 0, %s48
      %s68 = sphi 0, %s68
      %s70 = sphi 0, %s68
      %s71 = sphi 0, %s70
      %s85 = sphi 0, %s71
      %s89 = sphi 0, %s89
      %s91 = sphi 0, %s89
      %s92 = sphi 0, %s91
      %s106 = sphi 0, %s92
      %s110 = sphi 0, %s110
      %s112 = sphi 0, %s110
      %s113 = sphi 0, %s112
      %s127 = sphi 0, %s113
      %s131 = sphi 0, %s131
      %s133 = sphi 0, %s131
      %s134 = sphi 0, %s133
      %s148 = sphi 0, %s134
      %s156 = sphi 0, %s158
      %s159 = sphi 0, %s156
      %s160 = sphi 0, %s159
      %s176 = sphi 0, %s160
    $region4: #{tpu_custom_call.1} parent=1 // loop_header_branch
      %25 = sbr.rel (%p23) target = $region8
    $region5: #{tpu_custom_call.1} parent=1 // loop_body
      %s27 = ssub.s32 %s22, 1
      %s28 = ssub.s32 %s22, 2
      %s35 = sadd.s32 1, %s30
      %p36 = scmp.ge.s32.totalorder %s35, 4
      %s37 = scalar_select %p36, 0, %s35
      %s38 = sadd.s32 1, %s29
      %s39 = scalar_select %p36, %s38, %s29
      %p40 = scmp.ge.s32.totalorder %s39, 1
      %s41 = scalar_select %p40, 0, %s39
      %s42 = ssub.s32 %s30, %s37
      %p43 = scmp.eq.s32.totalorder %s42, 0
      %s45 = sadd.s32 %s44, 1
      %s46 = scalar_select %p43, %s44, %s45
      %p49 = pneg %p43
      %p50 = scmp.eq.s32.totalorder %s22, 3
      %p51 = por %p49, %p50
      %p52 = scmp.ne.s32.totalorder %s44, %s47
      %p53 = scmp.eq.s32.totalorder %s22, 0
      %p54 = por %p52, %p53
      %p55 = scmp.ne.s32.totalorder %s44, %s47
      %p56 = scmp.eq.s32.totalorder %s27, 3
      %p57 = por %p55, %p56
      %p58 = scmp.ne.s32.totalorder %s47, %s48
      %p59 = scmp.eq.s32.totalorder %s27, 0
      %p60 = por %p58, %p59
      %p61 = scmp.ne.s32.totalorder %s47, %s48
      %p62 = scmp.eq.s32.totalorder %s28, 3
      %p63 = por %p61, %p62
      %p65 = scmp.ne.s32.totalorder %s48, %s64
      %p66 = scmp.eq.s32.totalorder %s28, 0
      %p67 = por %p65, %p66
      %s69 = sadd.s32 %s68, 1
      %p72 = scmp.eq.s32.totalorder %s22, 3
      %p73 = scmp.ne.s32.totalorder %s68, %s70
      %p74 = scmp.eq.s32.totalorder %s22, 0
      %p75 = por %p73, %p74
      %p76 = scmp.ne.s32.totalorder %s68, %s70
      %p77 = scmp.eq.s32.totalorder %s27, 3
      %p78 = por %p76, %p77
      %p79 = scmp.ne.s32.totalorder %s70, %s71
      %p80 = scmp.eq.s32.totalorder %s27, 0
      %p81 = por %p79, %p80
      %p82 = scmp.ne.s32.totalorder %s70, %s71
      %p83 = scmp.eq.s32.totalorder %s28, 3
      %p84 = por %p82, %p83
      %p86 = scmp.ne.s32.totalorder %s71, %s85
      %p87 = scmp.eq.s32.totalorder %s28, 0
      %p88 = por %p86, %p87
      %s90 = sadd.s32 %s89, 1
      %p93 = scmp.eq.s32.totalorder %s22, 3
      %p94 = scmp.ne.s32.totalorder %s89, %s91
      %p95 = scmp.eq.s32.totalorder %s22, 0
      %p96 = por %p94, %p95
      %p97 = scmp.ne.s32.totalorder %s89, %s91
      %p98 = scmp.eq.s32.totalorder %s27, 3
      %p99 = por %p97, %p98
      %p100 = scmp.ne.s32.totalorder %s91, %s92
      %p101 = scmp.eq.s32.totalorder %s27, 0
      %p102 = por %p100, %p101
      %p103 = scmp.ne.s32.totalorder %s91, %s92
      %p104 = scmp.eq.s32.totalorder %s28, 3
      %p105 = por %p103, %p104
      %p107 = scmp.ne.s32.totalorder %s92, %s106
      %p108 = scmp.eq.s32.totalorder %s28, 0
      %p109 = por %p107, %p108
      %s111 = sadd.s32 %s110, 1
      %p114 = scmp.eq.s32.totalorder %s22, 3
      %p115 = scmp.ne.s32.totalorder %s110, %s112
      %p116 = scmp.eq.s32.totalorder %s22, 0
      %p117 = por %p115, %p116
      %p118 = scmp.ne.s32.totalorder %s110, %s112
      %p119 = scmp.eq.s32.totalorder %s27, 3
      %p120 = por %p118, %p119
      %p121 = scmp.ne.s32.totalorder %s112, %s113
      %p122 = scmp.eq.s32.totalorder %s27, 0
      %p123 = por %p121, %p122
      %p124 = scmp.ne.s32.totalorder %s112, %s113
      %p125 = scmp.eq.s32.totalorder %s28, 3
      %p126 = por %p124, %p125
      %p128 = scmp.ne.s32.totalorder %s113, %s127
      %p129 = scmp.eq.s32.totalorder %s28, 0
      %p130 = por %p128, %p129
      %s132 = sadd.s32 %s131, 1
      %p135 = scmp.eq.s32.totalorder %s22, 3
      %p136 = scmp.ne.s32.totalorder %s131, %s133
      %p137 = scmp.eq.s32.totalorder %s22, 0
      %p138 = por %p136, %p137
      %p139 = scmp.ne.s32.totalorder %s131, %s133
      %p140 = scmp.eq.s32.totalorder %s27, 3
      %p141 = por %p139, %p140
      %p142 = scmp.ne.s32.totalorder %s133, %s134
      %p143 = scmp.eq.s32.totalorder %s27, 0
      %p144 = por %p142, %p143
      %p145 = scmp.ne.s32.totalorder %s133, %s134
      %p146 = scmp.eq.s32.totalorder %s28, 3
      %p147 = por %p145, %p146
      %p149 = scmp.ne.s32.totalorder %s134, %s148
      %p150 = scmp.eq.s32.totalorder %s28, 0
      %p151 = por %p149, %p150
      %s152 = ssub.s32 %s30, %s37
      %s153 = ssub.s32 %s29, %s41
      %s154 = sor.u32 %s152, %s153
      %p155 = scmp.eq.s32.totalorder %s154, 0
      %s157 = sadd.s32 %s156, 1
      %s158 = scalar_select %p155, %s156, %s157
      %p161 = pneg %p155
      %p162 = scmp.eq.s32.totalorder %s22, 3
      %p163 = por %p161, %p162
      %p164 = scmp.ne.s32.totalorder %s156, %s159
      %p165 = scmp.eq.s32.totalorder %s22, 0
      %p166 = por %p164, %p165
      %p167 = scmp.ne.s32.totalorder %s156, %s159
      %p168 = scmp.eq.s32.totalorder %s27, 3
      %p169 = por %p167, %p168
      %p170 = scmp.ne.s32.totalorder %s159, %s160
      %p171 = scmp.eq.s32.totalorder %s27, 0
      %p172 = por %p170, %p171
      %p173 = scmp.ne.s32.totalorder %s159, %s160
      %p174 = scmp.eq.s32.totalorder %s28, 3
      %p175 = por %p173, %p174
      %p177 = scmp.ne.s32.totalorder %s160, %s176
      %p178 = scmp.eq.s32.totalorder %s28, 0
      %p179 = por %p177, %p178
      %p180 = scmp.le.s32.totalorder 1, %s22
      %p181 = scmp.lt.s32.totalorder %s22, 5
      %p182 = pnand %p180, %p181
      %p183 = pneg %p182
      // Predicated region
      $region9: #{tpu_custom_call.1} parent=5 // pred_check
        _
      $region10: #{tpu_custom_call.1} parent=5 // pred_check_branch
        %185 = sbr.rel (%p182) target = $region12
      $region11: #{tpu_custom_call.1} parent=5 // pred_region
        %s186 = ssub.s32 %s22, 1
        // Predicated region
        $region13: #{tpu_custom_call.1} parent=11 // pred_check
          %p187 = pneg %p81
        $region14: #{tpu_custom_call.1} parent=11 // pred_check_branch
          %189 = sbr.rel (%p187) target = $region16
        $region15: #{tpu_custom_call.1} parent=11 // pred_region
          _
        $region16: #{tpu_custom_call.1} parent=11 // pred_fallthru
          _
        // Predicated region
        $region17: #{tpu_custom_call.1} parent=11 // pred_check
          %p190 = pneg %p102
        $region18: #{tpu_custom_call.1} parent=11 // pred_check_branch
          %192 = sbr.rel (%p190) target = $region20
        $region19: #{tpu_custom_call.1} parent=11 // pred_region
          _
        $region20: #{tpu_custom_call.1} parent=11 // pred_fallthru
          _
        // Predicated region
        $region21: #{tpu_custom_call.1} parent=11 // pred_check
          %p193 = pneg %p123
        $region22: #{tpu_custom_call.1} parent=11 // pred_check_branch
          %195 = sbr.rel (%p193) target = $region24
        $region23: #{tpu_custom_call.1} parent=11 // pred_region
          _
        $region24: #{tpu_custom_call.1} parent=11 // pred_fallthru
          _
        // Predicated region
        $region25: #{tpu_custom_call.1} parent=11 // pred_check
          %p196 = pneg %p144
        $region26: #{tpu_custom_call.1} parent=11 // pred_check_branch
          %198 = sbr.rel (%p196) target = $region28
        $region27: #{tpu_custom_call.1} parent=11 // pred_region
          _
        $region28: #{tpu_custom_call.1} parent=11 // pred_fallthru
          _
      $region12: #{tpu_custom_call.1} parent=5 // pred_fallthru
        _
      %p199 = scmp.lt.s32.totalorder %s22, 4
      // Predicated region
      $region29: #{tpu_custom_call.1} parent=5 // pred_check
        %p200 = pneg %p199
      $region30: #{tpu_custom_call.1} parent=5 // pred_check_branch
        %202 = sbr.rel (%p200) target = $region32
      $region31: #{tpu_custom_call.1} parent=5 // pred_region
        // Predicated region
        $region33: #{tpu_custom_call.1} parent=31 // pred_check
          %p203 = pneg %p54
        $region34: #{tpu_custom_call.1} parent=31 // pred_check_branch
          %205 = sbr.rel (%p203) target = $region36
        $region35: #{tpu_custom_call.1} parent=31 // pred_region
          %s206 = sand.u32 %s44, 1
          %s207 = scalar_lea.sflag [#allocation6], %s206
          %s208 = sand.u32 %s44, 1
          %s209 = smul.addr %s208, 24
          %s210 = scalar_lea.vmem [#allocation5], %s209
          %s212 = ssub.s32 384, 384
          %213 = vsyncadd %s207, %s212
          %s214 = smul.addr %s30, 3
          %s215 = smul.addr %s214, 128
          %s216 = scalar_lea.hbm %s1, %s215
          %s217 = sshll.u32 %s210, 4
          %s218 = int_to_ptr.vmem [resolvable:$true] %s217
          %223 = dma.hbm_to_vmem [thread:$0]  %s216, 384, %s218, %s207, 128, 128, 8
        $region36: #{tpu_custom_call.1} parent=31 // pred_fallthru
          _
      $region32: #{tpu_custom_call.1} parent=5 // pred_fallthru
        _
      %p224 = scmp.le.s32.totalorder 1, %s22
      %p225 = scmp.lt.s32.totalorder %s22, 5
      %p226 = pnand %p224, %p225
      %p227 = pneg %p226
      // Predicated region
      $region37: #{tpu_custom_call.1} parent=5 // pred_check
        _
      $region38: #{tpu_custom_call.1} parent=5 // pred_check_branch
        %229 = sbr.rel (%p226) target = $region40
      $region39: #{tpu_custom_call.1} parent=5 // pred_region
        %s230 = ssub.s32 %s22, 1
        %s231 = sand.u32 %s47, 1
        %s232 = scalar_lea.sflag [#allocation6], %s231
        %s233 = sand.u32 %s47, 1
        %s234 = smul.addr %s233, 24
        %s235 = scalar_lea.vmem [#allocation5], %s234
        // Predicated region
        $region41: #{tpu_custom_call.1} parent=39 // pred_check
          %p236 = pneg %p60
        $region42: #{tpu_custom_call.1} parent=39 // pred_check_branch
          %238 = sbr.rel (%p236) target = $region44
        $region43: #{tpu_custom_call.1} parent=39 // pred_region
          %239 = dma.done %s232, 384
        $region44: #{tpu_custom_call.1} parent=39 // pred_fallthru
          _
        %s240 = sand.u32 %s47, 1
        %s241 = scalar_lea.sflag [#allocation6], %s240
        %s242 = sand.u32 %s47, 1
        %s243 = smul.addr %s242, 24
        %s244 = scalar_lea.vmem [#allocation5], %s243
        %p245 = pneg %p60
        %p246 = pneg %p57
        %p247 = pneg %p81
        %p248 = pneg %p78
        %p249 = pneg %p102
        %p250 = pneg %p99
        %p251 = pneg %p123
        %p252 = pneg %p120
        %p253 = pneg %p144
        %p254 = pneg %p141
        %p255 = pneg %p172
        %p256 = pneg %p169
        %s257 = sand.u32 %s159, 1
        %s258 = scalar_lea.sflag [#allocation7], %s257
        %s259 = sand.u32 %s159, 1
        %s260 = smul.addr %s259, 8
        %s261 = scalar_lea.vmem [#allocation8], %s260
        %s262 = smul.u32 %s32, 8
        %s263 = smul.u32 %s31, 8
        %s264 = sadd.s32 %s262, %s263
        %s265 = sld [smem:[#allocation4 + %s264]]
        %s266 = scalar_lea.vmem %s235, %s265 [#allocation5]
        %v267 = vld [vmem:[%s266] sm:$0x1]
        %268 = vst [vmem:[#allocation2] sm:$0x1] %v267
        %s269 = sadd.s32 %s264, 1
        %s270 = sld [smem:[#allocation4 + %s269]]
        %s271 = scalar_lea.vmem %s235, %s270 [#allocation5]
        %v272 = vld [vmem:[%s271] sm:$0x1]
        %273 = vst [vmem:[#allocation2 + $0x1] sm:$0x1] %v272
        %s274 = sadd.s32 %s264, 2
        %s275 = sld [smem:[#allocation4 + %s274]]
        %s276 = scalar_lea.vmem %s235, %s275 [#allocation5]
        %v277 = vld [vmem:[%s276] sm:$0x1]
        %278 = vst [vmem:[#allocation2 + $0x2] sm:$0x1] %v277
        %s279 = sadd.s32 %s264, 3
        %s280 = sld [smem:[#allocation4 + %s279]]
        %s281 = scalar_lea.vmem %s235, %s280 [#allocation5]
        %v282 = vld [vmem:[%s281] sm:$0x1]
        %283 = vst [vmem:[#allocation2 + $0x3] sm:$0x1] %v282
        %s284 = sadd.s32 %s264, 4
        %s285 = sld [smem:[#allocation4 + %s284]]
        %s286 = scalar_lea.vmem %s235, %s285 [#allocation5]
        %v287 = vld [vmem:[%s286] sm:$0x1]
        %288 = vst [vmem:[#allocation2 + $0x4] sm:$0x1] %v287
        %s289 = sadd.s32 %s264, 5
        %s290 = sld [smem:[#allocation4 + %s289]]
        %s291 = scalar_lea.vmem %s235, %s290 [#allocation5]
        %v292 = vld [vmem:[%s291] sm:$0x1]
        %293 = vst [vmem:[#allocation2 + $0x5] sm:$0x1] %v292
        %s294 = sadd.s32 %s264, 6
        %s295 = sld [smem:[#allocation4 + %s294]]
        %s296 = scalar_lea.vmem %s235, %s295 [#allocation5]
        %v297 = vld [vmem:[%s296] sm:$0x1]
        %298 = vst [vmem:[#allocation2 + $0x6] sm:$0x1] %v297
        %s299 = sadd.s32 %s264, 7
        %s300 = sld [smem:[#allocation4 + %s299]]
        %s301 = scalar_lea.vmem %s235, %s300 [#allocation5]
        %v302 = vld [vmem:[%s301] sm:$0x1]
        %303 = vst [vmem:[#allocation2 + $0x7] sm:$0x1] %v302
        %s304 = scalar_lea.vmem %s2, %s32
        %v305 = vld [vmem:[%s304] sm:$0x1]
        %s306 = scalar_lea.vmem %s3, %s32
        %v307 = vld [vmem:[%s306] sm:$0x1]
        %s308 = scalar_lea.vmem %s4, %s32
        %v309 = vld [vmem:[%s308] sm:$0x1]
        %s310 = scalar_lea.vmem %s5, %s32
        %v311 = vld [vmem:[%s310] sm:$0x1]
        %v312 = vld [vmem:[#allocation2] sm:$0xff]
        %v313 = vlaneseq
        %v314 = vshrl.u32 %v313, 7
        %v315 = vsub.s32 0, %v314
        %v316 = vrot.slane %v311, %v315
        %v317 = vmul.f32 %v312, %v316
        %318 = vadd.xlane.f32.xlu0 %v317
        %v319 = vpop.xlane.xlu0 %318
        %v320 = vsub.f32 %v312, %v319
        %v321 = vlaneseq
        %v322 = vshrl.u32 %v321, 7
        %v323 = vsub.s32 0, %v322
        %v324 = vrot.slane %v309, %v323
        %v325 = vmul.f32 %v320, %v324
        %v326 = vmul.f32 %v325, %v325
        %v327 = vmul.f32 %v326, %v316
        %328 = vadd.xlane.f32.xlu0 %v327
        %v329 = vpop.xlane.xlu0 %328
        %v330 = vadd.f32 %v329, 1e-05
        %v331 = vrsqrt.pop %v330
        %v332 = vmul.f32 %v325, %v331
        %v333 = vlaneseq
        %v334 = vshrl.u32 %v333, 7
        %v335 = vsub.s32 0, %v334
        %v336 = vrot.slane %v305, %v335
        %v337 = vmul.f32 %v332, %v336
        %v338 = vlaneseq
        %v339 = vshrl.u32 %v338, 7
        %v340 = vsub.s32 0, %v339
        %v341 = vrot.slane %v307, %v340
        %v342 = vadd.f32 %v337, %v341
        %v343 = vmul.f32 %v342, %v324
        %v344 = vsub.f32 %v309, 1.0
        %v345 = vlaneseq
        %v346 = vshrl.u32 %v345, 7
        %v347 = vsub.s32 0, %v346
        %v348 = vrot.slane %v344, %v347
        %v349 = vadd.f32 %v343, %v348
        %350 = vst [vmem:[%s261] sm:$0xff] %v349
        %s351 = sand.u32 %s159, 1
        %s352 = scalar_lea.sflag [#allocation7], %s351
        %s353 = sand.u32 %s159, 1
        %s354 = smul.addr %s353, 8
        %s355 = scalar_lea.vmem [#allocation8], %s354
        // Predicated region
        $region45: #{tpu_custom_call.1} parent=39 // pred_check
          %p356 = pneg %p169
        $region46: #{tpu_custom_call.1} parent=39 // pred_check_branch
          %358 = sbr.rel (%p356) target = $region48
        $region47: #{tpu_custom_call.1} parent=39 // pred_region
          %s360 = ssub.s32 128, 128
          %361 = vsyncadd %s352, %s360
          %s362 = sadd.s32 %s31, %s32
          %s363 = smul.addr %s362, 128
          %s364 = scalar_lea.hbm %s6, %s363
          %s366 = sshll.u32 %s355, 4
          %s367 = int_to_ptr.vmem [resolvable:$true] %s366
          %369 = dma.vmem_to_hbm [thread:$0]  %s367, 128, %s364, %s352
        $region48: #{tpu_custom_call.1} parent=39 // pred_fallthru
          _
      $region40: #{tpu_custom_call.1} parent=5 // pred_fallthru
        _
      %p370 = scmp.le.s32.totalorder 2, %s22
      // Predicated region
      $region49: #{tpu_custom_call.1} parent=5 // pred_check
        %p371 = pneg %p370
      $region50: #{tpu_custom_call.1} parent=5 // pred_check_branch
        %373 = sbr.rel (%p371) target = $region52
      $region51: #{tpu_custom_call.1} parent=5 // pred_region
        %s374 = ssub.s32 %s22, 2
        // Predicated region
        $region53: #{tpu_custom_call.1} parent=51 // pred_check
          %p375 = pneg %p175
        $region54: #{tpu_custom_call.1} parent=51 // pred_check_branch
          %377 = sbr.rel (%p375) target = $region56
        $region55: #{tpu_custom_call.1} parent=51 // pred_region
          %s378 = sand.u32 %s160, 1
          %s379 = scalar_lea.sflag [#allocation7], %s378
          %s380 = sand.u32 %s160, 1
          %s381 = smul.addr %s380, 8
          %s382 = scalar_lea.vmem [#allocation8], %s381
          %383 = dma.done %s379, 128
        $region56: #{tpu_custom_call.1} parent=51 // pred_fallthru
          _
      $region52: #{tpu_custom_call.1} parent=5 // pred_fallthru
        _
    $region6: #{tpu_custom_call.1} parent=1 // loop_footer
      %s26 = sadd.s32 1, %s22
    $region7: #{tpu_custom_call.1} parent=1 // loop_footer_branch
      %21 = sbr.rel target = $region3
    $region8: #{tpu_custom_call.1} parent=1 // loop_exit
      _
    %384 = vsyncpa [#allocation6], 1
    %s385 = scalar_lea.sflag [#allocation6], 1
    %386 = vsyncpa %s385, 1
    %387 = vsyncpa [#allocation7], 1
    %s388 = scalar_lea.sflag [#allocation7], 1
    %389 = vsyncpa %s388, 1

</llo_original>
